<compile_context>
chip_gen: v7x
topology: tpu7x:2x2x1
jax: 0.10.0
libtpu: 0.0.40
codegen_flags: <defaults>
</compile_context>

<pallas_src>
import math
import inspect
import functools

import jax
import jax.numpy as jnp
from jax import lax
from jax.experimental import pallas as pl
from jax.experimental.pallas import tpu as pltpu

EPS = 1e-5  # nn.LayerNorm default eps


# --------------------------------------------------------------------------- helpers
def _round_up(n, m):
    return ((n + m - 1) // m) * m


def _cdiv(a, b):
    return -(-a // b)


def _tpu_generation():
    try:
        kind = jax.devices()[0].device_kind.lower()
    except Exception:
        kind = ""
    if "v7" in kind or "7x" in kind:
        return 7
    if "v5" in kind:
        return 5
    return 6


def _vmem_cap_bytes(gen):
    # v7x: 64 MiB per TensorCore -> leave headroom; v5e/v6e have 128 MiB physical VMEM.
    return (56 << 20) if gen >= 7 else (100 << 20)


def _supports_pipeline_mode():
    """Feature check (instead of a broad try/except) for BlockSpec(pipeline_mode=...)."""
    if not hasattr(pl, "Buffered"):
        return False
    try:
        return "pipeline_mode" in inspect.signature(pl.BlockSpec).parameters
    except (TypeError, ValueError):
        return False


def _choose_row_tile(n_rows, sub, target, min_steps):
    """Largest row tile <= target that (a) is a multiple of the sublane pack,
    (b) still gives >= min_steps grid steps when the data allows, and (c) prefers
    an exact divisor of n_rows so no row padding (no wrapper pad copy) is needed."""
    cap = max(sub, _round_up(_cdiv(n_rows, min_steps), sub))
    rt = max(sub, min(_round_up(target, sub), cap))
    if n_rows % sub == 0:
        cand = rt
        while cand >= max(sub, rt // 2):
            if n_rows % cand == 0:
                return cand
            cand -= sub
    return rt


# ------------------------------------------------------------------- in-kernel math
def _masked_layer_norm(v, gamma, beta, true_dim):
    """LayerNorm over the last axis. Padded columns (index >= true_dim) must be zero
    on entry; statistics are computed over exactly `true_dim` elements."""
    padded = v.shape[-1]
    mu = jnp.sum(v, axis=-1, keepdims=True) * (1.0 / true_dim)
    vc = v - mu
    if padded != true_dim:  # static branch: mask only when feature padding exists
        mask = lax.broadcasted_iota(jnp.int32, (1, padded), 1) < true_dim
        vc = jnp.where(mask, vc, 0.0)
    var = jnp.sum(vc * vc, axis=-1, keepdims=True) * (1.0 / true_dim)
    return vc * lax.rsqrt(var + EPS) * gamma + beta


def _gelu(h, approx):
    if approx:
        # tanh form -> EUP slot (nearly free in the VLIW bundle); slightly different
        # numerics from nn.GELU()'s default exact-erf form.
        return jax.nn.gelu(h, approximate=True)
    return 0.5 * h * (1.0 + lax.erf(h * (1.0 / math.sqrt(2.0))))


# ----------------------------------------------------------------- resident kernel
def _mlp_kernel_resident(x_ref,
                         g1_ref, b1_ref,      # norm1 gamma/beta   (1, D_in_p)
                         w1_ref, bb1_ref,     # dense1 W/b         (D_in_p, H_p), (1, H_p)
                         g2_ref, b2_ref,      # norm2 gamma/beta   (1, H_p)
                         w2_ref, bb2_ref,     # dense2 W/b         (H_p, D_out_p), (1, D_out_p)
                         o_ref,
                         *, d_in, hidden, mm_dtype, gelu_approx):
    # Hoisted single reads of the small parameter rows (f32 for LN / bias math).
    g1 = g1_ref[...].astype(jnp.float32)
    b1 = b1_ref[...].astype(jnp.float32)
    bb1 = bb1_ref[...].astype(jnp.float32)
    g2 = g2_ref[...].astype(jnp.float32)
    b2 = b2_ref[...].astype(jnp.float32)
    bb2 = bb2_ref[...].astype(jnp.float32)

    x = x_ref[...].astype(jnp.float32)
    xn = _masked_layer_norm(x, g1, b1, d_in).astype(mm_dtype)

    h = jnp.dot(xn, w1_ref[...], preferred_element_type=jnp.float32) + bb1
    hn = _masked_layer_norm(h, g2, b2, hidden)
    g = _gelu(hn, gelu_approx).astype(mm_dtype)

    out = jnp.dot(g, w2_ref[...], preferred_element_type=jnp.float32) + bb2
    o_ref[...] = out.astype(o_ref.dtype)


# ----------------------------------------------------------------- streaming kernel
def _mlp_kernel_stream(x_ref,
                       g1_ref, b1_ref,        # norm1 gamma/beta   (1, D_in_p)
                       bb1_ref,               # dense1 bias        (1, H_p)
                       g2_ref, b2_ref,        # norm2 gamma/beta   (1, H_p)
                       bb2_ref,               # dense2 bias        (1, D_out_p)
                       w1_hbm,                # (n_hblk, D_in_p, hk)  in HBM
                       w2_hbm,                # (n_hblk, hk, D_out_p) in HBM
                       o_ref,
                       h_scr, acc_scr, w1_buf, w2_buf, sem1, sem2,
                       *, d_in, hidden, hk, n_hblk, mm_dtype, gelu_approx):
    g1 = g1_ref[...].astype(jnp.float32)
    b1 = b1_ref[...].astype(jnp.float32)
    g2 = g2_ref[...].astype(jnp.float32)
    b2 = b2_ref[...].astype(jnp.float32)
    bb2 = bb2_ref[...].astype(jnp.float32)

    x = x_ref[...].astype(jnp.float32)
    h_p = h_scr.shape[-1]

    # ---- LayerNorm(in_features) ----
    xn = _masked_layer_norm(x, g1, b1, d_in).astype(mm_dtype)

    def w1_copy(k, slot):
        return pltpu.make_async_copy(w1_hbm.at[k], w1_buf.at[slot], sem1.at[slot])

    def w2_copy(k, slot):
        return pltpu.make_async_copy(w2_hbm.at[k], w2_buf.at[slot], sem2.at[slot])

    # ---- pass 1: h = LN1(x) @ w1 + b1, streaming w1 column blocks (double-buffered) ----
    w1_copy(0, 0).start()

    @pl.loop(0, n_hblk)
    def _(k):
        slot = k % 2
        w1_copy(k, slot).wait()

        @pl.when(k + 1 < n_hblk)
        def _():
            w1_copy(k + 1, 1 - slot).start()

        col = pl.multiple_of(k * hk, 128)
        hblk = jnp.dot(xn, w1_buf[slot], preferred_element_type=jnp.float32)
        h_scr[:, pl.ds(col, hk)] = hblk + bb1_ref[:, pl.ds(col, hk)].astype(jnp.float32)

    # Prefetch the first w2 block while LayerNorm2 + GELU run on the VPU/EUP.
    w2_copy(0, 0).start()

    # ---- LayerNorm(hidden_features) + GELU over the full (padded) hidden row ----
    h = h_scr[...]
    hn = _masked_layer_norm(h, g2, b2, hidden)
    h_scr[...] = _gelu(hn, gelu_approx)

    # ---- pass 2: out = GELU(LN2(h)) @ w2 + b2, streaming w2 row blocks ----
    acc_scr[...] = jnp.zeros_like(acc_scr)

    @pl.loop(0, n_hblk)
    def _(k):
        slot = k % 2
        w2_copy(k, slot).wait()

        @pl.when(k + 1 < n_hblk)
        def _():
            w2_copy(k + 1, 1 - slot).start()

        col = pl.multiple_of(k * hk, 128)
        gblk = h_scr[:, pl.ds(col, hk)].astype(mm_dtype)
        acc_scr[...] += jnp.dot(gblk, w2_buf[slot], preferred_element_type=jnp.float32)

    o_ref[...] = (acc_scr[...] + bb2).astype(o_ref.dtype)


# ------------------------------------------------------------------------- wrapper
def two_layer_mlp(x, params, *, row_tile=None, hidden_block=None,
                  matmul_dtype=None, gelu_approx=False, force_stream=False):
    """Fused LayerNorm -> Linear -> LayerNorm -> GELU -> Linear.

    x: (B, S, in_features). params: see init_params.
    matmul_dtype: dtype fed to the MXU (default: weight dtype). Passing jnp.bfloat16
      for f32 weights gives 3-7x matmul throughput but loosens accuracy below the
      1e-4 tolerance used in the self-test.
    gelu_approx: tanh-approximate GELU (EUP) instead of exact erf (matches PyTorch
      default only when False).
    """
    B, S, D_in = x.shape
    H = params["w1"].shape[1]
    D_out = params["w2"].shape[1]
    w_dtype = jnp.dtype(params["w1"].dtype)
    mm_dtype = jnp.dtype(matmul_dtype) if matmul_dtype is not None else w_dtype

    gen = _tpu_generation()
    cap = _vmem_cap_bytes(gen)
    if row_tile is None:
        # v7x has only 64 MiB VMEM/TC -> smaller row tiles; v5e/v6e afford longer M runs.
        row_tile = 256 if gen >= 7 else 512

    N = B * S
    xb = jnp.dtype(x.dtype).itemsize
    wb = mm_dtype.itemsize
    sub = 8 if xb >= 4 else 16               # sublane pack (f32: 8, bf16/f16: 16)
    min_steps = 4 if gen >= 7 else 2         # >= 2 grid steps per TensorCore on v7x
    rt = _choose_row_tile(N, sub, row_tile, min_steps)

    D_in_p = _round_up(D_in, 128)
    D_out_p = _round_up(D_out, 128)
    H_p128 = _round_up(H, 128)

    buffered1 = _supports_pipeline_mode()
    w_copies = 1 if buffered1 else 2         # weights double-buffer without Buffered(1)
    param_bytes = 2 * (2 * D_in_p + 3 * H_p128 + D_out_p) * max(wb, 4)

    def resident_need(rt_):
        return (w_copies * (D_in_p * H_p128 + H_p128 * D_out_p) * wb
                + 2 * rt_ * (D_in_p + D_out_p) * xb              # pipelined x / out tiles
                + 6 * rt_ * max(D_in_p, H_p128, D_out_p) * 4     # live f32 LN/GELU temporaries
                + param_bytes)

    use_stream = force_stream or (resident_need(rt) > int(cap * 0.9))

    def param_spec(shape):
        # Block-invariant parameter rows/matrices: single-buffer when supported.
        if buffered1:
            return pl.BlockSpec(shape, lambda i: (0, 0), pipeline_mode=pl.Buffered(1))
        return pl.BlockSpec(shape, lambda i: (0, 0))

    def pad2(a, r, c):
        if a.shape == (r, c):
            return a
        return jnp.pad(a, ((0, r - a.shape[0]), (0, c - a.shape[1])))

    w1_full = params["w1"].astype(mm_dtype)
    w2_full = params["w2"].astype(mm_dtype)

    # ------------------------------------------------ path 1: weights resident in VMEM
    if not use_stream:
        H_p = H_p128
        N_p = _round_up(N, rt)
        x2d = x.reshape(N, D_in)
        if (N_p, D_in_p) != (N, D_in):
            x2d = jnp.pad(x2d, ((0, N_p - N), (0, D_in_p - D_in)))

        g1 = pad2(params["g1"], 1, D_in_p)
        b1 = pad2(params["b1"], 1, D_in_p)
        w1 = pad2(w1_full, D_in_p, H_p)
        bb1 = pad2(params["bb1"], 1, H_p)
        g2 = pad2(params["g2"], 1, H_p)
        b2 = pad2(params["b2"], 1, H_p)
        w2 = pad2(w2_full, H_p, D_out_p)
        bb2 = pad2(params["bb2"], 1, D_out_p)

        vmem_limit = int(min(max(resident_need(rt) * 3 // 2, 32 << 20), cap))
        kernel = functools.partial(_mlp_kernel_resident, d_in=D_in, hidden=H,
                                   mm_dtype=mm_dtype, gelu_approx=gelu_approx)

        out2d = pl.pallas_call(
            kernel,
            out_shape=jax.ShapeDtypeStruct((N_p, D_out_p), x.dtype),
            grid_spec=pltpu.PrefetchScalarGridSpec(
                num_scalar_prefetch=0,
                grid=(N_p // rt,),
                in_specs=[
                    pl.BlockSpec((rt, D_in_p), lambda i: (i, 0)),        # x rows
                    param_spec((1, D_in_p)), param_spec((1, D_in_p)),    # norm1
                    param_spec((D_in_p, H_p)), param_spec((1, H_p)),     # dense1
                    param_spec((1, H_p)), param_spec((1, H_p)),          # norm2
                    param_spec((H_p, D_out_p)), param_spec((1, D_out_p)),  # dense2
                ],
                out_specs=pl.BlockSpec((rt, D_out_p), lambda i: (i, 0)),
            ),
            compiler_params=pltpu.CompilerParams(
                dimension_semantics=("parallel",),
                vmem_limit_bytes=vmem_limit),
        )(x2d, g1, b1, w1, bb1, g2, b2, w2, bb2)

        return out2d[:N, :D_out].reshape(B, S, D_out)

    # ------------------------------------------- path 2: weights streamed from HBM
    hk = _round_up(hidden_block, 128) if hidden_block is not None else 512
    hk = min(hk, H_p128)
    H_p = _round_up(H, hk)
    n_hblk = H_p // hk

    def stream_need(rt_):
        return (2 * (D_in_p + D_out_p) * hk * wb                 # double-buffered weight blocks
                + rt_ * (H_p + D_out_p) * 4                      # hidden scratch + accumulator
                + 2 * rt_ * (D_in_p + D_out_p) * xb              # pipelined x / out tiles
                + 4 * rt_ * max(D_in_p, H_p) * 4                 # live f32 LN/GELU temporaries
                + param_bytes)

    while rt > sub and stream_need(rt) > int(cap * 0.9):
        rt = max(sub, _round_up(rt // 2, sub))

    N_p = _round_up(N, rt)
    x2d = x.reshape(N, D_in)
    if (N_p, D_in_p) != (N, D_in):
        x2d = jnp.pad(x2d, ((0, N_p - N), (0, D_in_p - D_in)))

    g1 = pad2(params["g1"], 1, D_in_p)
    b1 = pad2(params["b1"], 1, D_in_p)
    bb1 = pad2(params["bb1"], 1, H_p)
    g2 = pad2(params["g2"], 1, H_p)
    b2 = pad2(params["b2"], 1, H_p)
    bb2 = pad2(params["bb2"], 1, D_out_p)

    # Pre-block weights so each DMA is a contiguous tile:
    #   w1 -> (n_hblk, D_in_p, hk) column blocks, w2 -> (n_hblk, hk, D_out_p) row blocks.
    w1p = pad2(w1_full, D_in_p, H_p)
    w2p = pad2(w2_full, H_p, D_out_p)
    w1_blocks = w1p.reshape(D_in_p, n_hblk, hk).transpose(1, 0, 2)
    w2_blocks = w2p.reshape(n_hblk, hk, D_out_p)

    vmem_limit = int(min(max(stream_need(rt) * 3 // 2, 32 << 20), cap))
    kernel = functools.partial(_mlp_kernel_stream, d_in=D_in, hidden=H,
                               hk=hk, n_hblk=n_hblk,
                               mm_dtype=mm_dtype, gelu_approx=gelu_approx)

    out2d = pl.pallas_call(
        kernel,
        out_shape=jax.ShapeDtypeStruct((N_p, D_out_p), x.dtype),
        grid_spec=pltpu.PrefetchScalarGridSpec(
            num_scalar_prefetch=0,
            grid=(N_p // rt,),
            in_specs=[
                pl.BlockSpec((rt, D_in_p), lambda i: (i, 0)),         # x rows
                param_spec((1, D_in_p)), param_spec((1, D_in_p)),     # norm1 gamma/beta
                param_spec((1, H_p)),                                 # dense1 bias
                param_spec((1, H_p)), param_spec((1, H_p)),           # norm2 gamma/beta
                param_spec((1, D_out_p)),                             # dense2 bias
                pl.BlockSpec(memory_space=pl.ANY),                    # w1 blocks (HBM)
                pl.BlockSpec(memory_space=pl.ANY),                    # w2 blocks (HBM)
            ],
            out_specs=pl.BlockSpec((rt, D_out_p), lambda i: (i, 0)),
            scratch_shapes=[
                pltpu.VMEM((rt, H_p), jnp.float32),        # hidden activations
                pltpu.VMEM((rt, D_out_p), jnp.float32),    # dense2 accumulator
                pltpu.VMEM((2, D_in_p, hk), mm_dtype),     # double-buffered w1 block
                pltpu.VMEM((2, hk, D_out_p), mm_dtype),    # double-buffered w2 block
                pltpu.SemaphoreType.DMA((2,)),
                pltpu.SemaphoreType.DMA((2,)),
            ],
        ),
        compiler_params=pltpu.CompilerParams(
            dimension_semantics=("parallel",),
            vmem_limit_bytes=vmem_limit),
    )(x2d, g1, b1, bb1, g2, b2, bb2, w1_blocks, w2_blocks)

    return out2d[:N, :D_out].reshape(B, S, D_out)


# ------------------------------------------------------------------ params & reference
def init_params(key, in_features, hidden_features, out_features, dtype=jnp.float32):
    """Deterministic init mimicking nn.Linear / nn.LayerNorm defaults."""
    k1, k2, k3, k4 = jax.random.split(key, 4)
    bound1 = 1.0 / math.sqrt(in_features)
    bound2 = 1.0 / math.sqrt(hidden_features)
    return {
        # norm1 (LayerNorm(in_features)): weight=1, bias=0
        "g1": jnp.ones((1, in_features), dtype),
        "b1": jnp.zeros((1, in_features), dtype),
        # dense1: stored as (in, hidden) so kernel does x @ W1 (== x @ W_pt.T)
        "w1": jax.random.uniform(k1, (in_features, hidden_features), dtype, -bound1, bound1),
        "bb1": jax.random.uniform(k2, (1, hidden_features), dtype, -bound1, bound1),
        # norm2 (LayerNorm(hidden_features))
        "g2": jnp.ones((1, hidden_features), dtype),
        "b2": jnp.zeros((1, hidden_features), dtype),
        # dense2
        "w2": jax.random.uniform(k3, (hidden_features, out_features), dtype, -bound2, bound2),
        "bb2": jax.random.uniform(k4, (1, out_features), dtype, -bound2, bound2),
    }


def _reference(x, p):
    """Pure-JAX reference matching the PyTorch forward."""
    def ln(v, g, b):
        mu = jnp.mean(v, -1, keepdims=True)
        var = jnp.mean((v - mu) ** 2, -1, keepdims=True)
        return (v - mu) / jnp.sqrt(var + EPS) * g + b
    h = ln(x, p["g1"][0], p["b1"][0]) @ p["w1"] + p["bb1"][0]
    h = ln(h, p["g2"][0], p["b2"][0])
    h = 0.5 * h * (1.0 + lax.erf(h / jnp.sqrt(2.0)))
    return h @ p["w2"] + p["bb2"][0]


if __name__ == "__main__":
    key = jax.random.PRNGKey(0)
    kx1, kp1, kx2, kp2 = jax.random.split(key, 4)

    # Config 1: small MLP -> exercises the VMEM-resident-weights path.
    B, S, D_IN, HID, D_OUT = 2, 8, 32, 64, 16
    x1 = jax.random.normal(kx1, (B, S, D_IN), jnp.float32)
    p1 = init_params(kp1, D_IN, HID, D_OUT)

    out1 = two_layer_mlp(x1, p1)
    jax.block_until_ready(out1)
    ref1 = _reference(x1, p1)
    assert out1.shape == (B, S, D_OUT)
    assert jnp.allclose(out1, ref1, atol=1e-4, rtol=1e-4), "resident path mismatch"

    # Same config forced through the streamed-weights path (single hidden block).
    out1s = two_layer_mlp(x1, p1, force_stream=True)
    jax.block_until_ready(out1s)
    assert jnp.allclose(out1s, ref1, atol=1e-4, rtol=1e-4), "stream path mismatch"

    # Config 2: multi-block hidden streaming (hidden 320 padded to 3 x 128 blocks).
    B2, S2, D_IN2, HID2, D_OUT2 = 2, 8, 64, 320, 96
    x2 = jax.random.normal(kx2, (B2, S2, D_IN2), jnp.float32)
    p2 = init_params(kp2, D_IN2, HID2, D_OUT2)
    out2 = two_layer_mlp(x2, p2, force_stream=True, hidden_block=128)
    jax.block_until_ready(out2)
    ref2 = _reference(x2, p2)
    assert out2.shape == (B2, S2, D_OUT2)
    assert jnp.allclose(out2, ref2, atol=1e-4, rtol=1e-4), "multi-block stream mismatch"

    print("KERNEL_OK")
</pallas_src>

<mosaic_0001>
module attributes {stable_mosaic.version = 11 : i64} {
  func.func @_mlp_kernel_resident(%arg0: i32, %arg1: memref<8x128xf32, #tpu.memory_space<vmem>>, %arg2: memref<1x128xf32, #tpu.memory_space<vmem>>, %arg3: memref<1x128xf32, #tpu.memory_space<vmem>>, %arg4: memref<128x128xf32, #tpu.memory_space<vmem>>, %arg5: memref<1x128xf32, #tpu.memory_space<vmem>>, %arg6: memref<1x128xf32, #tpu.memory_space<vmem>>, %arg7: memref<1x128xf32, #tpu.memory_space<vmem>>, %arg8: memref<128x128xf32, #tpu.memory_space<vmem>>, %arg9: memref<1x128xf32, #tpu.memory_space<vmem>>, %arg10: memref<8x128xf32, #tpu.memory_space<vmem>>) attributes {dimension_semantics = [#tpu.dimension_semantics<parallel>], iteration_bounds = array<i64: 2>, scalar_prefetch = 0 : i64, scratch_operands = 0 : i64, tpu.core_type = #tpu.core_type<tc>, window_params = [{transform_indices = @transform_0, window_bounds = array<i64: 8, 128>}, {pipeline_mode = #tpu.pipeline_mode<synchronous>, transform_indices = @transform_1, window_bounds = array<i64: 1, 128>}, {pipeline_mode = #tpu.pipeline_mode<synchronous>, transform_indices = @transform_2, window_bounds = array<i64: 1, 128>}, {pipeline_mode = #tpu.pipeline_mode<synchronous>, transform_indices = @transform_3, window_bounds = array<i64: 128, 128>}, {pipeline_mode = #tpu.pipeline_mode<synchronous>, transform_indices = @transform_4, window_bounds = array<i64: 1, 128>}, {pipeline_mode = #tpu.pipeline_mode<synchronous>, transform_indices = @transform_5, window_bounds = array<i64: 1, 128>}, {pipeline_mode = #tpu.pipeline_mode<synchronous>, transform_indices = @transform_6, window_bounds = array<i64: 1, 128>}, {pipeline_mode = #tpu.pipeline_mode<synchronous>, transform_indices = @transform_7, window_bounds = array<i64: 128, 128>}, {pipeline_mode = #tpu.pipeline_mode<synchronous>, transform_indices = @transform_8, window_bounds = array<i64: 1, 128>}, {transform_indices = @transform_9, window_bounds = array<i64: 8, 128>}]} {
    %c0 = arith.constant 0 : index
    %c0_0 = arith.constant 0 : index
    %0 = vector.load %arg2[%c0, %c0_0] : memref<1x128xf32, #tpu.memory_space<vmem>>, vector<1x128xf32>
    %c0_1 = arith.constant 0 : index
    %c0_2 = arith.constant 0 : index
    %1 = vector.load %arg3[%c0_1, %c0_2] : memref<1x128xf32, #tpu.memory_space<vmem>>, vector<1x128xf32>
    %c0_3 = arith.constant 0 : index
    %c0_4 = arith.constant 0 : index
    %2 = vector.load %arg5[%c0_3, %c0_4] : memref<1x128xf32, #tpu.memory_space<vmem>>, vector<1x128xf32>
    %c0_5 = arith.constant 0 : index
    %c0_6 = arith.constant 0 : index
    %3 = vector.load %arg6[%c0_5, %c0_6] : memref<1x128xf32, #tpu.memory_space<vmem>>, vector<1x128xf32>
    %c0_7 = arith.constant 0 : index
    %c0_8 = arith.constant 0 : index
    %4 = vector.load %arg7[%c0_7, %c0_8] : memref<1x128xf32, #tpu.memory_space<vmem>>, vector<1x128xf32>
    %c0_9 = arith.constant 0 : index
    %c0_10 = arith.constant 0 : index
    %5 = vector.load %arg9[%c0_9, %c0_10] : memref<1x128xf32, #tpu.memory_space<vmem>>, vector<1x128xf32>
    %c0_11 = arith.constant 0 : index
    %c0_12 = arith.constant 0 : index
    %6 = vector.load %arg1[%c0_11, %c0_12] : memref<8x128xf32, #tpu.memory_space<vmem>>, vector<8x128xf32>
    %cst = arith.constant dense<0.000000e+00> : vector<8xf32>
    %7 = vector.multi_reduction <add>, %6, %cst [1] : vector<8x128xf32> to vector<8xf32>
    %8 = vector.shape_cast %7 : vector<8xf32> to vector<8x1xf32>
    %cst_13 = arith.constant 3.125000e-02 : f32
    %9 = vector.broadcast %cst_13 : f32 to vector<8x1xf32>
    %10 = arith.mulf %8, %9 : vector<8x1xf32>
    %11 = vector.broadcast %10 : vector<8x1xf32> to vector<8x128xf32>
    %12 = arith.subf %6, %11 : vector<8x128xf32>
    %13 = tpu.iota {dimensions = array<i32: 1>} : vector<1x128xi32>
    %c32_i32 = arith.constant 32 : i32
    %14 = vector.broadcast %c32_i32 : i32 to vector<1x128xi32>
    %15 = arith.cmpi slt, %13, %14 : vector<1x128xi32>
    %cst_14 = arith.constant 0.000000e+00 : f32
    %16 = vector.shape_cast %15 : vector<1x128xi1> to vector<1x128xi1>
    %17 = vector.broadcast %16 : vector<1x128xi1> to vector<8x128xi1>
    %18 = vector.broadcast %cst_14 : f32 to vector<8x128xf32>
    %19 = arith.select %17, %12, %18 : vector<8x128xi1>, vector<8x128xf32>
    %20 = arith.mulf %19, %19 : vector<8x128xf32>
    %cst_15 = arith.constant dense<0.000000e+00> : vector<8xf32>
    %21 = vector.multi_reduction <add>, %20, %cst_15 [1] : vector<8x128xf32> to vector<8xf32>
    %22 = vector.shape_cast %21 : vector<8xf32> to vector<8x1xf32>
    %cst_16 = arith.constant 3.125000e-02 : f32
    %23 = vector.broadcast %cst_16 : f32 to vector<8x1xf32>
    %24 = arith.mulf %22, %23 : vector<8x1xf32>
    %cst_17 = arith.constant 9.99999974E-6 : f32
    %25 = vector.broadcast %cst_17 : f32 to vector<8x1xf32>
    %26 = arith.addf %24, %25 : vector<8x1xf32>
    %27 = math.rsqrt %26 : vector<8x1xf32>
    %28 = vector.broadcast %27 : vector<8x1xf32> to vector<8x128xf32>
    %29 = arith.mulf %19, %28 : vector<8x128xf32>
    %30 = vector.broadcast %0 : vector<1x128xf32> to vector<8x128xf32>
    %31 = arith.mulf %29, %30 : vector<8x128xf32>
    %32 = vector.broadcast %1 : vector<1x128xf32> to vector<8x128xf32>
    %33 = arith.addf %31, %32 : vector<8x128xf32>
    %c0_18 = arith.constant 0 : index
    %c0_19 = arith.constant 0 : index
    %34 = vector.load %arg4[%c0_18, %c0_19] : memref<128x128xf32, #tpu.memory_space<vmem>>, vector<128x128xf32>
    %cst_20 = arith.constant dense<0.000000e+00> : vector<8x128xf32>
    %35 = tpu.matmul %33, %34, %cst_20 {dimension_numbers = #tpu.dot_dimension_numbers<[1], [0], [0], [1], [0, 0, 1, 1], [], []>} : vector<8x128xf32>, vector<128x128xf32>, vector<8x128xf32> -> vector<8x128xf32>
    %36 = vector.broadcast %2 : vector<1x128xf32> to vector<8x128xf32>
    %37 = arith.addf %35, %36 : vector<8x128xf32>
    %cst_21 = arith.constant dense<0.000000e+00> : vector<8xf32>
    %38 = vector.multi_reduction <add>, %37, %cst_21 [1] : vector<8x128xf32> to vector<8xf32>
    %39 = vector.shape_cast %38 : vector<8xf32> to vector<8x1xf32>
    %cst_22 = arith.constant 1.562500e-02 : f32
    %40 = vector.broadcast %cst_22 : f32 to vector<8x1xf32>
    %41 = arith.mulf %39, %40 : vector<8x1xf32>
    %42 = vector.broadcast %41 : vector<8x1xf32> to vector<8x128xf32>
    %43 = arith.subf %37, %42 : vector<8x128xf32>
    %44 = tpu.iota {dimensions = array<i32: 1>} : vector<1x128xi32>
    %c64_i32 = arith.constant 64 : i32
    %45 = vector.broadcast %c64_i32 : i32 to vector<1x128xi32>
    %46 = arith.cmpi slt, %44, %45 : vector<1x128xi32>
    %cst_23 = arith.constant 0.000000e+00 : f32
    %47 = vector.shape_cast %46 : vector<1x128xi1> to vector<1x128xi1>
    %48 = vector.broadcast %47 : vector<1x128xi1> to vector<8x128xi1>
    %49 = vector.broadcast %cst_23 : f32 to vector<8x128xf32>
    %50 = arith.select %48, %43, %49 : vector<8x128xi1>, vector<8x128xf32>
    %51 = arith.mulf %50, %50 : vector<8x128xf32>
    %cst_24 = arith.constant dense<0.000000e+00> : vector<8xf32>
    %52 = vector.multi_reduction <add>, %51, %cst_24 [1] : vector<8x128xf32> to vector<8xf32>
    %53 = vector.shape_cast %52 : vector<8xf32> to vector<8x1xf32>
    %cst_25 = arith.constant 1.562500e-02 : f32
    %54 = vector.broadcast %cst_25 : f32 to vector<8x1xf32>
    %55 = arith.mulf %53, %54 : vector<8x1xf32>
    %cst_26 = arith.constant 9.99999974E-6 : f32
    %56 = vector.broadcast %cst_26 : f32 to vector<8x1xf32>
    %57 = arith.addf %55, %56 : vector<8x1xf32>
    %58 = math.rsqrt %57 : vector<8x1xf32>
    %59 = vector.broadcast %58 : vector<8x1xf32> to vector<8x128xf32>
    %60 = arith.mulf %50, %59 : vector<8x128xf32>
    %61 = vector.broadcast %3 : vector<1x128xf32> to vector<8x128xf32>
    %62 = arith.mulf %60, %61 : vector<8x128xf32>
    %63 = vector.broadcast %4 : vector<1x128xf32> to vector<8x128xf32>
    %64 = arith.addf %62, %63 : vector<8x128xf32>
    %cst_27 = arith.constant 5.000000e-01 : f32
    %65 = vector.broadcast %cst_27 : f32 to vector<8x128xf32>
    %66 = arith.mulf %65, %64 : vector<8x128xf32>
    %cst_28 = arith.constant 0.707106769 : f32
    %67 = vector.broadcast %cst_28 : f32 to vector<8x128xf32>
    %68 = arith.mulf %64, %67 : vector<8x128xf32>
    %69 = math.erf %68 : vector<8x128xf32>
    %cst_29 = arith.constant 1.000000e+00 : f32
    %70 = vector.broadcast %cst_29 : f32 to vector<8x128xf32>
    %71 = arith.addf %70, %69 : vector<8x128xf32>
    %72 = arith.mulf %66, %71 : vector<8x128xf32>
    %c0_30 = arith.constant 0 : index
    %c0_31 = arith.constant 0 : index
    %73 = vector.load %arg8[%c0_30, %c0_31] : memref<128x128xf32, #tpu.memory_space<vmem>>, vector<128x128xf32>
    %cst_32 = arith.constant dense<0.000000e+00> : vector<8x128xf32>
    %74 = tpu.matmul %72, %73, %cst_32 {dimension_numbers = #tpu.dot_dimension_numbers<[1], [0], [0], [1], [0, 0, 1, 1], [], []>} : vector<8x128xf32>, vector<128x128xf32>, vector<8x128xf32> -> vector<8x128xf32>
    %75 = vector.broadcast %5 : vector<1x128xf32> to vector<8x128xf32>
    %76 = arith.addf %74, %75 : vector<8x128xf32>
    %c0_33 = arith.constant 0 : index
    %c0_34 = arith.constant 0 : index
    %77 = vector.load %arg10[%c0_33, %c0_34] : memref<8x128xf32, #tpu.memory_space<vmem>>, vector<8x128xf32>
    tpu.vector_store %arg10[%c0_33, %c0_34], %76 {strides = array<i32>} : memref<8x128xf32, #tpu.memory_space<vmem>>, vector<8x128xf32>,
    return
  }
  func.func @transform_0(%arg0: i32) -> (i32, i32) {
    %c0_i32 = arith.constant 0 : i32
    %c0_i32_0 = arith.constant 0 : i32
    return %arg0, %c0_i32 : i32, i32
  }
  func.func @transform_1(%arg0: i32) -> (i32, i32) {
    %c0_i32 = arith.constant 0 : i32
    %c0_i32_0 = arith.constant 0 : i32
    %c0_i32_1 = arith.constant 0 : i32
    return %c0_i32, %c0_i32_0 : i32, i32
  }
  func.func @transform_2(%arg0: i32) -> (i32, i32) {
    %c0_i32 = arith.constant 0 : i32
    %c0_i32_0 = arith.constant 0 : i32
    %c0_i32_1 = arith.constant 0 : i32
    return %c0_i32, %c0_i32_0 : i32, i32
  }
  func.func @transform_3(%arg0: i32) -> (i32, i32) {
    %c0_i32 = arith.constant 0 : i32
    %c0_i32_0 = arith.constant 0 : i32
    %c0_i32_1 = arith.constant 0 : i32
    return %c0_i32, %c0_i32_0 : i32, i32
  }
  func.func @transform_4(%arg0: i32) -> (i32, i32) {
    %c0_i32 = arith.constant 0 : i32
    %c0_i32_0 = arith.constant 0 : i32
    %c0_i32_1 = arith.constant 0 : i32
    return %c0_i32, %c0_i32_0 : i32, i32
  }
  func.func @transform_5(%arg0: i32) -> (i32, i32) {
    %c0_i32 = arith.constant 0 : i32
    %c0_i32_0 = arith.constant 0 : i32
    %c0_i32_1 = arith.constant 0 : i32
    return %c0_i32, %c0_i32_0 : i32, i32
  }
  func.func @transform_6(%arg0: i32) -> (i32, i32) {
    %c0_i32 = arith.constant 0 : i32
    %c0_i32_0 = arith.constant 0 : i32
    %c0_i32_1 = arith.constant 0 : i32
    return %c0_i32, %c0_i32_0 : i32, i32
  }
  func.func @transform_7(%arg0: i32) -> (i32, i32) {
    %c0_i32 = arith.constant 0 : i32
    %c0_i32_0 = arith.constant 0 : i32
    %c0_i32_1 = arith.constant 0 : i32
    return %c0_i32, %c0_i32_0 : i32, i32
  }
  func.func @transform_8(%arg0: i32) -> (i32, i32) {
    %c0_i32 = arith.constant 0 : i32
    %c0_i32_0 = arith.constant 0 : i32
    %c0_i32_1 = arith.constant 0 : i32
    return %c0_i32, %c0_i32_0 : i32, i32
  }
  func.func @transform_9(%arg0: i32) -> (i32, i32) {
    %c0_i32 = arith.constant 0 : i32
    %c0_i32_0 = arith.constant 0 : i32
    return %arg0, %c0_i32 : i32, i32
  }
}

</mosaic_0001>

<llo_original>
// kernel: tpu_custom_call.1
$region0: #{tpu_custom_call.1}
  #allocation0 [shape = 'u32[]', space=smem, size = 0x4, offset = 0x4, fixed_abs, tag = 'smem constant byte address 0x4 - core index']
  #allocation1 [shape = 'u32[144,128]{1,0:T(1,128)}', space=vmem, size = 0x12000, scoped, tag = 'internal scratch']
  %s0 = inlined_call_operand.hbm [shape: f32[16,128], index: 0, kind: input, shape index: {}]
  %s1 = inlined_call_operand.vmem [shape: f32[1,128], index: 1, kind: input, shape index: {}]
  %s2 = inlined_call_operand.vmem [shape: f32[1,128], index: 2, kind: input, shape index: {}]
  %s3 = inlined_call_operand.hbm [shape: f32[128,128], index: 3, kind: input, shape index: {}]
  %s4 = inlined_call_operand.vmem [shape: f32[1,128], index: 4, kind: input, shape index: {}]
  %s5 = inlined_call_operand.vmem [shape: f32[1,128], index: 5, kind: input, shape index: {}]
  %s6 = inlined_call_operand.vmem [shape: f32[1,128], index: 6, kind: input, shape index: {}]
  %s7 = inlined_call_operand.hbm [shape: f32[128,128], index: 7, kind: input, shape index: {}]
  %s8 = inlined_call_operand.vmem [shape: f32[1,128], index: 8, kind: input, shape index: {}]
  %s9 = inlined_call_operand.hbm [shape: f32[16,128], index: 9, kind: output, shape index: {}]
  %s10 = sld [smem:[#allocation0]]
  $region81: #{tpu_custom_call.1} parent=0
    _
  %s12 = ssub.s32 1, %s10
  %s13 = scalar_select 0, %s12, %s10
  $region1: #{tpu_custom_call.1} parent=0
    #allocation2 [shape = 'u8[8192]{0}', space=vmem, size = 0x2000, scoped, tag = 'input window, operand 0']
    #allocation3 [shape = 's32[2]{0}', space=sflag, size = 0x8, scoped, tag = 'scoped memory for tpu_custom_call.1']
    #allocation4 [shape = 's32[2]{0}', space=sflag, size = 0x8, scoped, tag = 'scoped memory for tpu_custom_call.1']
    #allocation5 [shape = 'u8[65536]{0}', space=vmem, size = 0x10000, scoped, tag = 'input window, operand 3, single buffered']
    #allocation6 [shape = 's32[1]{0}', space=sflag, size = 0x4, scoped, tag = 'scoped memory for tpu_custom_call.1']
    #allocation7 [shape = 'u8[65536]{0}', space=vmem, size = 0x10000, scoped, tag = 'input window, operand 7, single buffered']
    #allocation8 [shape = 'u8[8192]{0}', space=vmem, size = 0x2000, scoped, tag = 'output window, operand 0']
    %14 = vsyncpa [#allocation3], 0
    %s15 = scalar_lea.sflag [#allocation3], 1
    %16 = vsyncpa %s15, 0
    %17 = vsyncpa [#allocation6], 0
    %18 = vsyncpa [#allocation4], 0
    %s19 = scalar_lea.sflag [#allocation4], 1
    %20 = vsyncpa %s19, 0
    loop: start=0, step=1, limit=4
    $region2: #{tpu_custom_call.1} parent=1 // loop_pre_header
      _
    $region3: #{tpu_custom_call.1} parent=1 // loop_header
      %s22 = sphi 0, %s26
      %p23 = scmp.ge.s32.totalorder %s22, 4
      %s32 = sphi 0, %s34
      %s35 = sphi 0, %s32
      %s36 = sphi 0, %s35
      %s52 = sphi 0, %s36
      %s56 = sphi 0, %s56
      %s58 = sphi 0, %s56
      %s59 = sphi 0, %s58
      %s73 = sphi 0, %s59
      %s77 = sphi 0, %s77
      %s79 = sphi 0, %s77
      %s80 = sphi 0, %s79
      %s94 = sphi 0, %s80
      %s98 = sphi 0, %s98
      %s100 = sphi 0, %s98
      %s101 = sphi 0, %s100
      %s115 = sphi 0, %s101
      %s119 = sphi 0, %s119
      %s121 = sphi 0, %s119
      %s122 = sphi 0, %s121
      %s136 = sphi 0, %s122
      %s140 = sphi 0, %s140
      %s142 = sphi 0, %s140
      %s143 = sphi 0, %s142
      %s157 = sphi 0, %s143
      %s161 = sphi 0, %s161
      %s163 = sphi 0, %s161
      %s164 = sphi 0, %s163
      %s178 = sphi 0, %s164
      %s182 = sphi 0, %s182
      %s184 = sphi 0, %s182
      %s185 = sphi 0, %s184
      %s199 = sphi 0, %s185
      %s203 = sphi 0, %s203
      %s205 = sphi 0, %s203
      %s206 = sphi 0, %s205
      %s220 = sphi 0, %s206
      %s226 = sphi 0, %s228
      %s229 = sphi 0, %s226
      %s230 = sphi 0, %s229
      %s246 = sphi 0, %s230
    $region4: #{tpu_custom_call.1} parent=1 // loop_header_branch
      %25 = sbr.rel (%p23) target = $region8
    $region5: #{tpu_custom_call.1} parent=1 // loop_body
      %s27 = ssub.s32 %s22, 1
      %s28 = ssub.s32 %s22, 2
      %s29 = sadd.s32 %s22, 1
      %s30 = ssub.s32 %s22, %s29
      %p31 = scmp.eq.s32.totalorder %s30, 0
      %s33 = sadd.s32 %s32, 1
      %s34 = scalar_select %p31, %s32, %s33
      %p37 = pneg %p31
      %p38 = scmp.eq.s32.totalorder %s22, 1
      %p39 = por %p37, %p38
      %p40 = scmp.ne.s32.totalorder %s32, %s35
      %p41 = scmp.eq.s32.totalorder %s22, 0
      %p42 = por %p40, %p41
      %p43 = scmp.ne.s32.totalorder %s32, %s35
      %p44 = scmp.eq.s32.totalorder %s27, 1
      %p45 = por %p43, %p44
      %p46 = scmp.ne.s32.totalorder %s35, %s36
      %p47 = scmp.eq.s32.totalorder %s27, 0
      %p48 = por %p46, %p47
      %p49 = scmp.ne.s32.totalorder %s35, %s36
      %p50 = scmp.eq.s32.totalorder %s28, 1
      %p51 = por %p49, %p50
      %p53 = scmp.ne.s32.totalorder %s36, %s52
      %p54 = scmp.eq.s32.totalorder %s28, 0
      %p55 = por %p53, %p54
      %s57 = sadd.s32 %s56, 1
      %p60 = scmp.eq.s32.totalorder %s22, 1
      %p61 = scmp.ne.s32.totalorder %s56, %s58
      %p62 = scmp.eq.s32.totalorder %s22, 0
      %p63 = por %p61, %p62
      %p64 = scmp.ne.s32.totalorder %s56, %s58
      %p65 = scmp.eq.s32.totalorder %s27, 1
      %p66 = por %p64, %p65
      %p67 = scmp.ne.s32.totalorder %s58, %s59
      %p68 = scmp.eq.s32.totalorder %s27, 0
      %p69 = por %p67, %p68
      %p70 = scmp.ne.s32.totalorder %s58, %s59
      %p71 = scmp.eq.s32.totalorder %s28, 1
      %p72 = por %p70, %p71
      %p74 = scmp.ne.s32.totalorder %s59, %s73
      %p75 = scmp.eq.s32.totalorder %s28, 0
      %p76 = por %p74, %p75
      %s78 = sadd.s32 %s77, 1
      %p81 = scmp.eq.s32.totalorder %s22, 1
      %p82 = scmp.ne.s32.totalorder %s77, %s79
      %p83 = scmp.eq.s32.totalorder %s22, 0
      %p84 = por %p82, %p83
      %p85 = scmp.ne.s32.totalorder %s77, %s79
      %p86 = scmp.eq.s32.totalorder %s27, 1
      %p87 = por %p85, %p86
      %p88 = scmp.ne.s32.totalorder %s79, %s80
      %p89 = scmp.eq.s32.totalorder %s27, 0
      %p90 = por %p88, %p89
      %p91 = scmp.ne.s32.totalorder %s79, %s80
      %p92 = scmp.eq.s32.totalorder %s28, 1
      %p93 = por %p91, %p92
      %p95 = scmp.ne.s32.totalorder %s80, %s94
      %p96 = scmp.eq.s32.totalorder %s28, 0
      %p97 = por %p95, %p96
      %s99 = sadd.s32 %s98, 1
      %p102 = scmp.eq.s32.totalorder %s22, 1
      %p103 = scmp.ne.s32.totalorder %s98, %s100
      %p104 = scmp.eq.s32.totalorder %s22, 0
      %p105 = por %p103, %p104
      %p106 = scmp.ne.s32.totalorder %s98, %s100
      %p107 = scmp.eq.s32.totalorder %s27, 1
      %p108 = por %p106, %p107
      %p109 = scmp.ne.s32.totalorder %s100, %s101
      %p110 = scmp.eq.s32.totalorder %s27, 0
      %p111 = por %p109, %p110
      %p112 = scmp.ne.s32.totalorder %s100, %s101
      %p113 = scmp.eq.s32.totalorder %s28, 1
      %p114 = por %p112, %p113
      %p116 = scmp.ne.s32.totalorder %s101, %s115
      %p117 = scmp.eq.s32.totalorder %s28, 0
      %p118 = por %p116, %p117
      %s120 = sadd.s32 %s119, 1
      %p123 = scmp.eq.s32.totalorder %s22, 1
      %p124 = scmp.ne.s32.totalorder %s119, %s121
      %p125 = scmp.eq.s32.totalorder %s22, 0
      %p126 = por %p124, %p125
      %p127 = scmp.ne.s32.totalorder %s119, %s121
      %p128 = scmp.eq.s32.totalorder %s27, 1
      %p129 = por %p127, %p128
      %p130 = scmp.ne.s32.totalorder %s121, %s122
      %p131 = scmp.eq.s32.totalorder %s27, 0
      %p132 = por %p130, %p131
      %p133 = scmp.ne.s32.totalorder %s121, %s122
      %p134 = scmp.eq.s32.totalorder %s28, 1
      %p135 = por %p133, %p134
      %p137 = scmp.ne.s32.totalorder %s122, %s136
      %p138 = scmp.eq.s32.totalorder %s28, 0
      %p139 = por %p137, %p138
      %s141 = sadd.s32 %s140, 1
      %p144 = scmp.eq.s32.totalorder %s22, 1
      %p145 = scmp.ne.s32.totalorder %s140, %s142
      %p146 = scmp.eq.s32.totalorder %s22, 0
      %p147 = por %p145, %p146
      %p148 = scmp.ne.s32.totalorder %s140, %s142
      %p149 = scmp.eq.s32.totalorder %s27, 1
      %p150 = por %p148, %p149
      %p151 = scmp.ne.s32.totalorder %s142, %s143
      %p152 = scmp.eq.s32.totalorder %s27, 0
      %p153 = por %p151, %p152
      %p154 = scmp.ne.s32.totalorder %s142, %s143
      %p155 = scmp.eq.s32.totalorder %s28, 1
      %p156 = por %p154, %p155
      %p158 = scmp.ne.s32.totalorder %s143, %s157
      %p159 = scmp.eq.s32.totalorder %s28, 0
      %p160 = por %p158, %p159
      %s162 = sadd.s32 %s161, 1
      %p165 = scmp.eq.s32.totalorder %s22, 1
      %p166 = scmp.ne.s32.totalorder %s161, %s163
      %p167 = scmp.eq.s32.totalorder %s22, 0
      %p168 = por %p166, %p167
      %p169 = scmp.ne.s32.totalorder %s161, %s163
      %p170 = scmp.eq.s32.totalorder %s27, 1
      %p171 = por %p169, %p170
      %p172 = scmp.ne.s32.totalorder %s163, %s164
      %p173 = scmp.eq.s32.totalorder %s27, 0
      %p174 = por %p172, %p173
      %p175 = scmp.ne.s32.totalorder %s163, %s164
      %p176 = scmp.eq.s32.totalorder %s28, 1
      %p177 = por %p175, %p176
      %p179 = scmp.ne.s32.totalorder %s164, %s178
      %p180 = scmp.eq.s32.totalorder %s28, 0
      %p181 = por %p179, %p180
      %s183 = sadd.s32 %s182, 1
      %p186 = scmp.eq.s32.totalorder %s22, 1
      %p187 = scmp.ne.s32.totalorder %s182, %s184
      %p188 = scmp.eq.s32.totalorder %s22, 0
      %p189 = por %p187, %p188
      %p190 = scmp.ne.s32.totalorder %s182, %s184
      %p191 = scmp.eq.s32.totalorder %s27, 1
      %p192 = por %p190, %p191
      %p193 = scmp.ne.s32.totalorder %s184, %s185
      %p194 = scmp.eq.s32.totalorder %s27, 0
      %p195 = por %p193, %p194
      %p196 = scmp.ne.s32.totalorder %s184, %s185
      %p197 = scmp.eq.s32.totalorder %s28, 1
      %p198 = por %p196, %p197
      %p200 = scmp.ne.s32.totalorder %s185, %s199
      %p201 = scmp.eq.s32.totalorder %s28, 0
      %p202 = por %p200, %p201
      %s204 = sadd.s32 %s203, 1
      %p207 = scmp.eq.s32.totalorder %s22, 1
      %p208 = scmp.ne.s32.totalorder %s203, %s205
      %p209 = scmp.eq.s32.totalorder %s22, 0
      %p210 = por %p208, %p209
      %p211 = scmp.ne.s32.totalorder %s203, %s205
      %p212 = scmp.eq.s32.totalorder %s27, 1
      %p213 = por %p211, %p212
      %p214 = scmp.ne.s32.totalorder %s205, %s206
      %p215 = scmp.eq.s32.totalorder %s27, 0
      %p216 = por %p214, %p215
      %p217 = scmp.ne.s32.totalorder %s205, %s206
      %p218 = scmp.eq.s32.totalorder %s28, 1
      %p219 = por %p217, %p218
      %p221 = scmp.ne.s32.totalorder %s206, %s220
      %p222 = scmp.eq.s32.totalorder %s28, 0
      %p223 = por %p221, %p222
      %s224 = ssub.s32 %s22, %s29
      %p225 = scmp.eq.s32.totalorder %s224, 0
      %s227 = sadd.s32 %s226, 1
      %s228 = scalar_select %p225, %s226, %s227
      %p231 = pneg %p225
      %p232 = scmp.eq.s32.totalorder %s22, 1
      %p233 = por %p231, %p232
      %p234 = scmp.ne.s32.totalorder %s226, %s229
      %p235 = scmp.eq.s32.totalorder %s22, 0
      %p236 = por %p234, %p235
      %p237 = scmp.ne.s32.totalorder %s226, %s229
      %p238 = scmp.eq.s32.totalorder %s27, 1
      %p239 = por %p237, %p238
      %p240 = scmp.ne.s32.totalorder %s229, %s230
      %p241 = scmp.eq.s32.totalorder %s27, 0
      %p242 = por %p240, %p241
      %p243 = scmp.ne.s32.totalorder %s229, %s230
      %p244 = scmp.eq.s32.totalorder %s28, 1
      %p245 = por %p243, %p244
      %p247 = scmp.ne.s32.totalorder %s230, %s246
      %p248 = scmp.eq.s32.totalorder %s28, 0
      %p249 = por %p247, %p248
      %p250 = scmp.le.s32.totalorder 1, %s22
      %p251 = scmp.lt.s32.totalorder %s22, 3
      %p252 = pnand %p250, %p251
      %p253 = pneg %p252
      // Predicated region
      $region9: #{tpu_custom_call.1} parent=5 // pred_check
        _
      $region10: #{tpu_custom_call.1} parent=5 // pred_check_branch
        %255 = sbr.rel (%p252) target = $region12
      $region11: #{tpu_custom_call.1} parent=5 // pred_region
        %s256 = ssub.s32 %s22, 1
        // Predicated region
        $region13: #{tpu_custom_call.1} parent=11 // pred_check
          %p257 = pneg %p69
        $region14: #{tpu_custom_call.1} parent=11 // pred_check_branch
          %259 = sbr.rel (%p257) target = $region16
        $region15: #{tpu_custom_call.1} parent=11 // pred_region
          _
        $region16: #{tpu_custom_call.1} parent=11 // pred_fallthru
          _
        // Predicated region
        $region17: #{tpu_custom_call.1} parent=11 // pred_check
          %p260 = pneg %p90
        $region18: #{tpu_custom_call.1} parent=11 // pred_check_branch
          %262 = sbr.rel (%p260) target = $region20
        $region19: #{tpu_custom_call.1} parent=11 // pred_region
          _
        $region20: #{tpu_custom_call.1} parent=11 // pred_fallthru
          _
        // Predicated region
        $region21: #{tpu_custom_call.1} parent=11 // pred_check
          %p263 = pneg %p111
        $region22: #{tpu_custom_call.1} parent=11 // pred_check_branch
          %265 = sbr.rel (%p263) target = $region24
        $region23: #{tpu_custom_call.1} parent=11 // pred_region
          %s267 = ssub.s32 2048, 2048
          %268 = vsyncadd [#allocation6], %s267
          %s269 = sshll.u32 [#allocation5], 4
          %s270 = int_to_ptr.vmem [resolvable:$true] %s269
          %275 = dma.hbm_to_vmem [thread:$0]  %s3, 2048, %s270, [#allocation6], 128, 128, 8
        $region24: #{tpu_custom_call.1} parent=11 // pred_fallthru
          _
        // Predicated region
        $region25: #{tpu_custom_call.1} parent=11 // pred_check
          %p276 = pneg %p132
        $region26: #{tpu_custom_call.1} parent=11 // pred_check_branch
          %278 = sbr.rel (%p276) target = $region28
        $region27: #{tpu_custom_call.1} parent=11 // pred_region
          _
        $region28: #{tpu_custom_call.1} parent=11 // pred_fallthru
          _
        // Predicated region
        $region29: #{tpu_custom_call.1} parent=11 // pred_check
          %p279 = pneg %p153
        $region30: #{tpu_custom_call.1} parent=11 // pred_check_branch
          %281 = sbr.rel (%p279) target = $region32
        $region31: #{tpu_custom_call.1} parent=11 // pred_region
          _
        $region32: #{tpu_custom_call.1} parent=11 // pred_fallthru
          _
        // Predicated region
        $region33: #{tpu_custom_call.1} parent=11 // pred_check
          %p282 = pneg %p174
        $region34: #{tpu_custom_call.1} parent=11 // pred_check_branch
          %284 = sbr.rel (%p282) target = $region36
        $region35: #{tpu_custom_call.1} parent=11 // pred_region
          _
        $region36: #{tpu_custom_call.1} parent=11 // pred_fallthru
          _
        // Predicated region
        $region37: #{tpu_custom_call.1} parent=11 // pred_check
          %p285 = pneg %p195
        $region38: #{tpu_custom_call.1} parent=11 // pred_check_branch
          %287 = sbr.rel (%p285) target = $region40
        $region39: #{tpu_custom_call.1} parent=11 // pred_region
          %s289 = ssub.s32 2048, 2048
          %290 = vsyncadd [#allocation6], %s289
          %s291 = sshll.u32 [#allocation7], 4
          %s292 = int_to_ptr.vmem [resolvable:$true] %s291
          %297 = dma.hbm_to_vmem [thread:$0]  %s7, 2048, %s292, [#allocation6], 128, 128, 8
        $region40: #{tpu_custom_call.1} parent=11 // pred_fallthru
          _
        // Predicated region
        $region41: #{tpu_custom_call.1} parent=11 // pred_check
          %p298 = pneg %p216
        $region42: #{tpu_custom_call.1} parent=11 // pred_check_branch
          %300 = sbr.rel (%p298) target = $region44
        $region43: #{tpu_custom_call.1} parent=11 // pred_region
          _
        $region44: #{tpu_custom_call.1} parent=11 // pred_fallthru
          _
      $region12: #{tpu_custom_call.1} parent=5 // pred_fallthru
        _
      %p301 = scmp.lt.s32.totalorder %s22, 2
      // Predicated region
      $region45: #{tpu_custom_call.1} parent=5 // pred_check
        %p302 = pneg %p301
      $region46: #{tpu_custom_call.1} parent=5 // pred_check_branch
        %304 = sbr.rel (%p302) target = $region48
      $region47: #{tpu_custom_call.1} parent=5 // pred_region
        // Predicated region
        $region49: #{tpu_custom_call.1} parent=47 // pred_check
          %p305 = pneg %p42
        $region50: #{tpu_custom_call.1} parent=47 // pred_check_branch
          %307 = sbr.rel (%p305) target = $region52
        $region51: #{tpu_custom_call.1} parent=47 // pred_region
          %s308 = sand.u32 %s32, 1
          %s309 = scalar_lea.sflag [#allocation3], %s308
          %s310 = sand.u32 %s32, 1
          %s311 = smul.addr %s310, 8
          %s312 = scalar_lea.vmem [#allocation2], %s311
          %s314 = ssub.s32 128, 128
          %315 = vsyncadd %s309, %s314
          %s316 = smul.addr %s22, 128
          %s317 = scalar_lea.hbm %s0, %s316
          %s319 = sshll.u32 %s312, 4
          %s320 = int_to_ptr.vmem [resolvable:$true] %s319
          %322 = dma.hbm_to_vmem [thread:$0]  %s317, 128, %s320, %s309
        $region52: #{tpu_custom_call.1} parent=47 // pred_fallthru
          _
      $region48: #{tpu_custom_call.1} parent=5 // pred_fallthru
        _
      %p323 = scmp.le.s32.totalorder 1, %s22
      %p324 = scmp.lt.s32.totalorder %s22, 3
      %p325 = pnand %p323, %p324
      %p326 = pneg %p325
      // Predicated region
      $region53: #{tpu_custom_call.1} parent=5 // pred_check
        _
      $region54: #{tpu_custom_call.1} parent=5 // pred_check_branch
        %328 = sbr.rel (%p325) target = $region56
      $region55: #{tpu_custom_call.1} parent=5 // pred_region
        %s329 = ssub.s32 %s22, 1
        %s330 = sand.u32 %s35, 1
        %s331 = scalar_lea.sflag [#allocation3], %s330
        %s332 = sand.u32 %s35, 1
        %s333 = smul.addr %s332, 8
        %s334 = scalar_lea.vmem [#allocation2], %s333
        // Predicated region
        $region57: #{tpu_custom_call.1} parent=55 // pred_check
          %p335 = pneg %p48
        $region58: #{tpu_custom_call.1} parent=55 // pred_check_branch
          %337 = sbr.rel (%p335) target = $region60
        $region59: #{tpu_custom_call.1} parent=55 // pred_region
          %338 = dma.done %s331, 128
        $region60: #{tpu_custom_call.1} parent=55 // pred_fallthru
          _
        // Predicated region
        $region61: #{tpu_custom_call.1} parent=55 // pred_check
          %p339 = pneg %p111
        $region62: #{tpu_custom_call.1} parent=55 // pred_check_branch
          %341 = sbr.rel (%p339) target = $region64
        $region63: #{tpu_custom_call.1} parent=55 // pred_region
          %342 = dma.done [#allocation6], 2048
        $region64: #{tpu_custom_call.1} parent=55 // pred_fallthru
          _
        // Predicated region
        $region65: #{tpu_custom_call.1} parent=55 // pred_check
          %p343 = pneg %p195
        $region66: #{tpu_custom_call.1} parent=55 // pred_check_branch
          %345 = sbr.rel (%p343) target = $region68
        $region67: #{tpu_custom_call.1} parent=55 // pred_region
          %346 = dma.done [#allocation6], 2048
        $region68: #{tpu_custom_call.1} parent=55 // pred_fallthru
          _
        %s347 = sand.u32 %s35, 1
        %s348 = scalar_lea.sflag [#allocation3], %s347
        %s349 = sand.u32 %s35, 1
        %s350 = smul.addr %s349, 8
        %s351 = scalar_lea.vmem [#allocation2], %s350
        %p352 = pneg %p48
        %p353 = pneg %p45
        %p354 = pneg %p69
        %p355 = pneg %p66
        %p356 = pneg %p90
        %p357 = pneg %p87
        %p358 = pneg %p111
        %p359 = pneg %p108
        %p360 = pneg %p132
        %p361 = pneg %p129
        %p362 = pneg %p153
        %p363 = pneg %p150
        %p364 = pneg %p174
        %p365 = pneg %p171
        %p366 = pneg %p195
        %p367 = pneg %p192
        %p368 = pneg %p216
        %p369 = pneg %p213
        %p370 = pneg %p242
        %p371 = pneg %p239
        %s372 = sand.u32 %s229, 1
        %s373 = scalar_lea.sflag [#allocation4], %s372
        %s374 = sand.u32 %s229, 1
        %s375 = smul.addr %s374, 8
        %s376 = scalar_lea.vmem [#allocation8], %s375
        %v377 = vld [vmem:[%s1] sm:$0x1]
        %v378 = vld [vmem:[%s2] sm:$0x1]
        %v379 = vld [vmem:[%s4] sm:$0x1]
        %v380 = vld [vmem:[%s5] sm:$0x1]
        %v381 = vld [vmem:[%s6] sm:$0x1]
        %v382 = vld [vmem:[%s8] sm:$0x1]
        %v383 = vld [vmem:[%s334] sm:$0xff]
        %384 = vadd.xlane.f32.xlu0 %v383
        %v385 = vpop.xlane.xlu0 %384
        %v386 = vmul.f32 %v385, 0.03125
        %v387 = vsub.f32 %v383, %v386
        %v388 = vlaneseq
        %v389 = vand.u32 %v388, 127
        %vm390 = vcmp.lt.s32.totalorder %v389, 32
        %v391 = vsel %vm390, 1, 0
        %vm392 = vcmp.eq.s32.totalorder %v391, 1
        %v393 = vsel %vm392, %v387, 0.0
        %v394 = vmul.f32 %v393, %v393
        %395 = vadd.xlane.f32.xlu0 %v394
        %v396 = vpop.xlane.xlu0 %395
        %v397 = vmul.f32 %v396, 0.03125
        %v398 = vadd.f32 %v397, 1e-05
        %v399 = vrsqrt.pop %v398
        %v400 = vmul.f32 %v393, %v399
        %v402 = vlaneseq
        %v403 = vshrl.u32 %v402, 7
        %v404 = vsub.s32 0, %v403
        %v405 = vrot.slane %v377, %v404
        %v407 = vmul.f32 %v400, %v405
        %v409 = vlaneseq
        %v410 = vshrl.u32 %v409, 7
        %v411 = vsub.s32 0, %v410
        %v412 = vrot.slane %v378, %v411
        %v414 = vadd.f32 %v407, %v412
        %v415 = vld [vmem:[#allocation5] sm:$0xff]
        %v416 = vld [vmem:[#allocation5 + $0x8] sm:$0xff]
        %v417 = vld [vmem:[#allocation5 + $0x10] sm:$0xff]
        %v418 = vld [vmem:[#allocation5 + $0x18] sm:$0xff]
        %v419 = vld [vmem:[#allocation5 + $0x20] sm:$0xff]
        %v420 = vld [vmem:[#allocation5 + $0x28] sm:$0xff]
        %v421 = vld [vmem:[#allocation5 + $0x30] sm:$0xff]
        %v422 = vld [vmem:[#allocation5 + $0x38] sm:$0xff]
        %v423 = vld [vmem:[#allocation5 + $0x40] sm:$0xff]
        %v424 = vld [vmem:[#allocation5 + $0x48] sm:$0xff]
        %v425 = vld [vmem:[#allocation5 + $0x50] sm:$0xff]
        %v426 = vld [vmem:[#allocation5 + $0x58] sm:$0xff]
        %v427 = vld [vmem:[#allocation5 + $0x60] sm:$0xff]
        %v428 = vld [vmem:[#allocation5 + $0x68] sm:$0xff]
        %v429 = vld [vmem:[#allocation5 + $0x70] sm:$0xff]
        %v430 = vld [vmem:[#allocation5 + $0x78] sm:$0xff]
        %v432 = vlaneseq
        %v433 = vshrl.u32 %v432, 7
        %v434 = vsub.s32 0, %v433
        %v435 = vrot.slane %v379, %v434
        %437 = vmatprep.subr.mxu0 0.0
        %438 = vmatpush1.msra.mxu0 %v415
        %439 = vmatprep.subr.mxu0 0.0
        %440 = vmatpush1.msra.mxu0 %v416
        %441 = vmatprep.subr.mxu0 0.0
        %442 = vmatpush1.msra.mxu0 %v417
        %443 = vmatprep.subr.mxu0 0.0
        %444 = vmatpush1.msra.mxu0 %v418
        %445 = vmatprep.subr.mxu0 0.0
        %446 = vmatpush1.msra.mxu0 %v419
        %447 = vmatprep.subr.mxu0 0.0
        %448 = vmatpush1.msra.mxu0 %v420
        %449 = vmatprep.subr.mxu0 0.0
        %450 = vmatpush1.msra.mxu0 %v421
        %451 = vmatprep.subr.mxu0 0.0
        %452 = vmatpush1.msra.mxu0 %v422
        %453 = vmatprep.subr.mxu0 0.0
        %454 = vmatpush1.msra.mxu0 %v423
        %455 = vmatprep.subr.mxu0 0.0
        %456 = vmatpush1.msra.mxu0 %v424
        %457 = vmatprep.subr.mxu0 0.0
        %458 = vmatpush1.msra.mxu0 %v425
        %459 = vmatprep.subr.mxu0 0.0
        %460 = vmatpush1.msra.mxu0 %v426
        %461 = vmatprep.subr.mxu0 0.0
        %462 = vmatpush1.msra.mxu0 %v427
        %463 = vmatprep.subr.mxu0 0.0
        %464 = vmatpush1.msra.mxu0 %v428
        %465 = vmatprep.subr.mxu0 0.0
        %466 = vmatpush1.msra.mxu0 %v429
        %467 = vmatprep.subr.mxu0 0.0
        %468 = vmatpush1.msra.mxu0 %v430
        %469 = vmatprep.subr.mxu0 0.0
        %470 = vmatpush1.msra.mxu0 0.0
        %471 = vmatprep.subr.mxu0 0.0
        %472 = vmatpush1.msra.mxu0 0.0
        %473 = vmatprep.subr.mxu0 0.0
        %474 = vmatpush1.msra.mxu0 0.0
        %475 = vmatprep.subr.mxu0 0.0
        %476 = vmatpush1.msra.mxu0 0.0
        %477 = vmatprep.subr.mxu0 0.0
        %478 = vmatpush1.msra.mxu0 0.0
        %479 = vmatprep.subr.mxu0 0.0
        %480 = vmatpush1.msra.mxu0 0.0
        %481 = vmatprep.subr.mxu0 0.0
        %482 = vmatpush1.msra.mxu0 0.0
        %483 = vmatprep.subr.mxu0 0.0
        %484 = vmatpush1.msra.mxu0 0.0
        %485 = vmatprep.subr.mxu0 0.0
        %486 = vmatpush1.msra.mxu0 0.0
        %487 = vmatprep.subr.mxu0 0.0
        %488 = vmatpush1.msra.mxu0 0.0
        %489 = vmatprep.subr.mxu0 0.0
        %490 = vmatpush1.msra.mxu0 0.0
        %491 = vmatprep.subr.mxu0 0.0
        %492 = vmatpush1.msra.mxu0 0.0
        %493 = vmatprep.subr.mxu0 0.0
        %494 = vmatpush1.msra.mxu0 0.0
        %495 = vmatprep.subr.mxu0 0.0
        %496 = vmatpush1.msra.mxu0 0.0
        %497 = vmatprep.subr.mxu0 0.0
        %498 = vmatpush1.msra.mxu0 0.0
        %499 = vmatprep.subr.mxu0 0.0
        %500 = vmatpush1.msra.mxu0 0.0
        %501 = vmatprep.mubr.f32.mxu0 0.0
        %502 = vmatmul.mubr.f32.gmra.mrb[0].mxu0 %v414
        %v503 = vpop.f32.mrb[0].mxu0
        %v504 = vadd.f32 %v435, %v503
        %v505 = vpop.f32.mrb[0].mxu0
        %506 = vdwg.mxu0
        %507 = vadd.xlane.f32.xlu0 %v504
        %v508 = vpop.xlane.xlu0 %507
        %v509 = vmul.f32 %v508, 0.015625
        %v510 = vsub.f32 %v504, %v509
        %vm511 = vcmp.lt.s32.totalorder %v389, 64
        %v512 = vsel %vm511, 1, 0
        %vm513 = vcmp.eq.s32.totalorder %v512, 1
        %v514 = vsel %vm513, %v510, 0.0
        %v515 = vmul.f32 %v514, %v514
        %516 = vadd.xlane.f32.xlu0 %v515
        %v517 = vpop.xlane.xlu0 %516
        %v518 = vmul.f32 %v517, 0.015625
        %v519 = vadd.f32 %v518, 1e-05
        %v520 = vrsqrt.pop %v519
        %v521 = vmul.f32 %v514, %v520
        %v523 = vlaneseq
        %v524 = vshrl.u32 %v523, 7
        %v525 = vsub.s32 0, %v524
        %v526 = vrot.slane %v380, %v525
        %v528 = vmul.f32 %v521, %v526
        %v530 = vlaneseq
        %v531 = vshrl.u32 %v530, 7
        %v532 = vsub.s32 0, %v531
        %v533 = vrot.slane %v381, %v532
        %v535 = vadd.f32 %v528, %v533
        %v536 = vmul.f32 %v535, 0.5
        %v537 = vmul.f32 %v535, 0.70710677
        %v538 = verf.f32.pop %v537
        %v539 = vadd.f32 %v538, 1.0
        %v540 = vmul.f32 %v536, %v539
        %v541 = vld [vmem:[#allocation7] sm:$0xff]
        %v542 = vld [vmem:[#allocation7 + $0x8] sm:$0xff]
        %v543 = vld [vmem:[#allocation7 + $0x10] sm:$0xff]
        %v544 = vld [vmem:[#allocation7 + $0x18] sm:$0xff]
        %v545 = vld [vmem:[#allocation7 + $0x20] sm:$0xff]
        %v546 = vld [vmem:[#allocation7 + $0x28] sm:$0xff]
        %v547 = vld [vmem:[#allocation7 + $0x30] sm:$0xff]
        %v548 = vld [vmem:[#allocation7 + $0x38] sm:$0xff]
        %v549 = vld [vmem:[#allocation7 + $0x40] sm:$0xff]
        %v550 = vld [vmem:[#allocation7 + $0x48] sm:$0xff]
        %v551 = vld [vmem:[#allocation7 + $0x50] sm:$0xff]
        %v552 = vld [vmem:[#allocation7 + $0x58] sm:$0xff]
        %v553 = vld [vmem:[#allocation7 + $0x60] sm:$0xff]
        %v554 = vld [vmem:[#allocation7 + $0x68] sm:$0xff]
        %v555 = vld [vmem:[#allocation7 + $0x70] sm:$0xff]
        %v556 = vld [vmem:[#allocation7 + $0x78] sm:$0xff]
        %v558 = vlaneseq
        %v559 = vshrl.u32 %v558, 7
        %v560 = vsub.s32 0, %v559
        %v561 = vrot.slane %v382, %v560
        %563 = vmatprep.subr.mxu0 0.0
        %564 = vmatpush1.msra.mxu0 %v541
        %565 = vmatprep.subr.mxu0 0.0
        %566 = vmatpush1.msra.mxu0 %v542
        %567 = vmatprep.subr.mxu0 0.0
        %568 = vmatpush1.msra.mxu0 %v543
        %569 = vmatprep.subr.mxu0 0.0
        %570 = vmatpush1.msra.mxu0 %v544
        %571 = vmatprep.subr.mxu0 0.0
        %572 = vmatpush1.msra.mxu0 %v545
        %573 = vmatprep.subr.mxu0 0.0
        %574 = vmatpush1.msra.mxu0 %v546
        %575 = vmatprep.subr.mxu0 0.0
        %576 = vmatpush1.msra.mxu0 %v547
        %577 = vmatprep.subr.mxu0 0.0
        %578 = vmatpush1.msra.mxu0 %v548
        %579 = vmatprep.subr.mxu0 0.0
        %580 = vmatpush1.msra.mxu0 %v549
        %581 = vmatprep.subr.mxu0 0.0
        %582 = vmatpush1.msra.mxu0 %v550
        %583 = vmatprep.subr.mxu0 0.0
        %584 = vmatpush1.msra.mxu0 %v551
        %585 = vmatprep.subr.mxu0 0.0
        %586 = vmatpush1.msra.mxu0 %v552
        %587 = vmatprep.subr.mxu0 0.0
        %588 = vmatpush1.msra.mxu0 %v553
        %589 = vmatprep.subr.mxu0 0.0
        %590 = vmatpush1.msra.mxu0 %v554
        %591 = vmatprep.subr.mxu0 0.0
        %592 = vmatpush1.msra.mxu0 %v555
        %593 = vmatprep.subr.mxu0 0.0
        %594 = vmatpush1.msra.mxu0 %v556
        %595 = vmatprep.subr.mxu0 0.0
        %596 = vmatpush1.msra.mxu0 0.0
        %597 = vmatprep.subr.mxu0 0.0
        %598 = vmatpush1.msra.mxu0 0.0
        %599 = vmatprep.subr.mxu0 0.0
        %600 = vmatpush1.msra.mxu0 0.0
        %601 = vmatprep.subr.mxu0 0.0
        %602 = vmatpush1.msra.mxu0 0.0
        %603 = vmatprep.subr.mxu0 0.0
        %604 = vmatpush1.msra.mxu0 0.0
        %605 = vmatprep.subr.mxu0 0.0
        %606 = vmatpush1.msra.mxu0 0.0
        %607 = vmatprep.subr.mxu0 0.0
        %608 = vmatpush1.msra.mxu0 0.0
        %609 = vmatprep.subr.mxu0 0.0
        %610 = vmatpush1.msra.mxu0 0.0
        %611 = vmatprep.subr.mxu0 0.0
        %612 = vmatpush1.msra.mxu0 0.0
        %613 = vmatprep.subr.mxu0 0.0
        %614 = vmatpush1.msra.mxu0 0.0
        %615 = vmatprep.subr.mxu0 0.0
        %616 = vmatpush1.msra.mxu0 0.0
        %617 = vmatprep.subr.mxu0 0.0
        %618 = vmatpush1.msra.mxu0 0.0
        %619 = vmatprep.subr.mxu0 0.0
        %620 = vmatpush1.msra.mxu0 0.0
        %621 = vmatprep.subr.mxu0 0.0
        %622 = vmatpush1.msra.mxu0 0.0
        %623 = vmatprep.subr.mxu0 0.0
        %624 = vmatpush1.msra.mxu0 0.0
        %625 = vmatprep.subr.mxu0 0.0
        %626 = vmatpush1.msra.mxu0 0.0
        %627 = vmatprep.mubr.f32.mxu0 0.0
        %628 = vmatmul.mubr.f32.gmra.mrb[0].mxu0 %v540
        %v629 = vpop.f32.mrb[0].mxu0
        %v630 = vadd.f32 %v561, %v629
        %v631 = vpop.f32.mrb[0].mxu0
        %632 = vdwg.mxu0
        %633 = vst [vmem:[%s376] sm:$0xff] %v630
        %s634 = sand.u32 %s229, 1
        %s635 = scalar_lea.sflag [#allocation4], %s634
        %s636 = sand.u32 %s229, 1
        %s637 = smul.addr %s636, 8
        %s638 = scalar_lea.vmem [#allocation8], %s637
        // Predicated region
        $region69: #{tpu_custom_call.1} parent=55 // pred_check
          %p639 = pneg %p239
        $region70: #{tpu_custom_call.1} parent=55 // pred_check_branch
          %641 = sbr.rel (%p639) target = $region72
        $region71: #{tpu_custom_call.1} parent=55 // pred_region
          %s643 = ssub.s32 128, 128
          %644 = vsyncadd %s635, %s643
          %s645 = smul.addr %s27, 128
          %s646 = scalar_lea.hbm %s9, %s645
          %s648 = sshll.u32 %s638, 4
          %s649 = int_to_ptr.vmem [resolvable:$true] %s648
          %651 = dma.vmem_to_hbm [thread:$0]  %s649, 128, %s646, %s635
        $region72: #{tpu_custom_call.1} parent=55 // pred_fallthru
          _
      $region56: #{tpu_custom_call.1} parent=5 // pred_fallthru
        _
      %p652 = scmp.le.s32.totalorder 2, %s22
      // Predicated region
      $region73: #{tpu_custom_call.1} parent=5 // pred_check
        %p653 = pneg %p652
      $region74: #{tpu_custom_call.1} parent=5 // pred_check_branch
        %655 = sbr.rel (%p653) target = $region76
      $region75: #{tpu_custom_call.1} parent=5 // pred_region
        %s656 = ssub.s32 %s22, 2
        // Predicated region
        $region77: #{tpu_custom_call.1} parent=75 // pred_check
          %p657 = pneg %p245
        $region78: #{tpu_custom_call.1} parent=75 // pred_check_branch
          %659 = sbr.rel (%p657) target = $region80
        $region79: #{tpu_custom_call.1} parent=75 // pred_region
          %s660 = sand.u32 %s230, 1
          %s661 = scalar_lea.sflag [#allocation4], %s660
          %s662 = sand.u32 %s230, 1
          %s663 = smul.addr %s662, 8
          %s664 = scalar_lea.vmem [#allocation8], %s663
          %665 = dma.done %s661, 128
        $region80: #{tpu_custom_call.1} parent=75 // pred_fallthru
          _
      $region76: #{tpu_custom_call.1} parent=5 // pred_fallthru
        _
    $region6: #{tpu_custom_call.1} parent=1 // loop_footer
      %s26 = sadd.s32 1, %s22
    $region7: #{tpu_custom_call.1} parent=1 // loop_footer_branch
      %21 = sbr.rel target = $region3
    $region8: #{tpu_custom_call.1} parent=1 // loop_exit
      _
    %666 = vsyncpa [#allocation3], 1
    %s667 = scalar_lea.sflag [#allocation3], 1
    %668 = vsyncpa %s667, 1
    %669 = vsyncpa [#allocation6], 1
    %670 = vsyncpa [#allocation4], 1
    %s671 = scalar_lea.sflag [#allocation4], 1
    %672 = vsyncpa %s671, 1

</llo_original>
